<compile_context>
chip_gen: v7x
topology: tpu7x:2x2x1
jax: 0.10.0
libtpu: 0.0.40
codegen_flags: <defaults>
</compile_context>

<pallas_src>
import functools

import jax
import jax.numpy as jnp
from jax.experimental import pallas as pl
from jax.experimental.pallas import tpu as pltpu


def _focal_loss_kernel(logits_ref, target_ref, out_ref, acc_ref, *,
                       gamma, n_rows, tile_n, mask_rows):
    i = pl.program_id(0)                 # core-split axis
    j = pl.program_id(1)                 # row-block reduction axis ("arbitrary")
    inner = pl.num_programs(1)

    @pl.when(j == 0)
    def _init():
        acc_ref[...] = jnp.zeros_like(acc_ref)

    x = logits_ref[...].astype(jnp.float32)          # (TILE_N, C), f32 math in-kernel
    t = target_ref[...]                              # (TILE_N, 1) int32

    # Per-row cross entropy: logp = logsumexp(x) - x[target]  (no (N,C) log_softmax temp)
    m = jnp.max(x, axis=-1, keepdims=True)                                   # (TILE_N, 1)
    lse = jnp.log(jnp.sum(jnp.exp(x - m), axis=-1, keepdims=True))           # (TILE_N, 1)
    col = jax.lax.broadcasted_iota(jnp.int32, x.shape, 1)                    # (TILE_N, C)
    # Targets are assumed in [0, C) (same contract as CrossEntropyLoss without
    # ignore_index); out-of-range targets would silently give x_t = 0.
    x_t = jnp.sum(jnp.where(col == t, x, 0.0), axis=-1, keepdims=True)       # (TILE_N, 1)
    logp = (m + lse) - x_t                                                   # >= 0

    # Focal modulation.
    p = jnp.exp(-logp)
    base = jnp.maximum(1.0 - p, 0.0)     # clamp: avoids NaN from pow(negative, float)
    if isinstance(gamma, (int, float)) and float(gamma) == int(gamma) and int(gamma) >= 0:
        g = int(gamma)                   # integer gamma -> cheap VPU multiplies
        if g == 0:
            mod = jnp.ones_like(base)
        else:
            mod = base                   # gamma == 2 -> a single multiply below
            for _ in range(g - 1):
                mod = mod * base
    else:
        # Non-integer (or traced) gamma: pow on the clamped base.
        mod = base ** jnp.float32(gamma)
    loss = mod * logp                                                        # (TILE_N, 1)

    if mask_rows:
        # Mask rows past the true N (remainder tiles and clamped duplicate blocks).
        # Keep this a select: garbage rows may be NaN/Inf and must not propagate.
        block_idx = i * inner + j
        row = jax.lax.broadcasted_iota(jnp.int32, loss.shape, 0)
        valid = (block_idx * tile_n + row) < n_rows
        loss = jnp.where(valid, loss, 0.0)

    acc_ref[...] += jnp.sum(loss, axis=0, keepdims=True)

    @pl.when(j == inner - 1)
    def _finalize():
        # One lane-dense store per split; wrapper reads element [0, 0].
        out_ref[0] = jnp.broadcast_to(acc_ref[...], out_ref.shape[1:])


def _chip_profile():
    """Per-generation tuning knobs, keyed off device_kind (conservative fallback)."""
    kind = ""
    try:
        kind = jax.devices()[0].device_kind.lower()
    except Exception:
        pass
    mib = 1024 * 1024
    if any(s in kind for s in ("v5e", "v5 lite", "v5lite", "v6e", "v6 lite", "v6lite")):
        # 1 TensorCore, 128 MiB physical VMEM: big blocks, no core split.
        return dict(num_cores=1, core_parallel=False,
                    vmem_budget=32 * mib, hbm_block=4 * mib, vmem_limit=64 * mib)
    if "v7" in kind:
        # 2 TensorCores, 64 MiB physical VMEM: shard rows across cores, smaller blocks.
        return dict(num_cores=2, core_parallel=True,
                    vmem_budget=16 * mib, hbm_block=2 * mib, vmem_limit=32 * mib)
    # Unknown generation (v4/v5p/...): safe defaults, no core split.
    return dict(num_cores=1, core_parallel=False,
                vmem_budget=16 * mib, hbm_block=2 * mib, vmem_limit=32 * mib)


def _pick_tile_n(n_rows, n_classes, itemsize, vmem_budget, hbm_block_bytes):
    """Rows per block, bounded by (a) an HBM-block byte target (pipeline/roofline
    efficiency, dtype-aware) and (b) an in-kernel VMEM estimate. The VMEM estimate
    charges lane-padded (128-lane) cost for the (row, 1) int32 target buffers and
    the (row, 1) f32 temporaries, which is what actually dominates when C is small."""
    row_vmem = (2 * n_classes * itemsize   # double-buffered logits input
                + 2 * 4 * 128              # double-buffered (row,1) i32 targets, lane-padded
                + 4 * n_classes * 4        # ~4 live (row,C) f32 temporaries
                + 6 * 4 * 128)             # ~6 live (row,1) f32 temporaries, lane-padded
    tile = min(vmem_budget // row_vmem,
               hbm_block_bytes // max(1, n_classes * itemsize),
               8192)
    align = 16 if itemsize < 4 else 8      # bf16 packs 16 rows per vreg sublane-pair
    tile = max(align, (tile // align) * align)
    return min(tile, max(align, ((n_rows + align - 1) // align) * align))


def focal_loss(logits, target, gamma=2.0, *, tile_n=None, num_splits=None):
    """Pallas TPU implementation of FocalLoss.forward (returns a scalar f32)."""
    n, c = logits.shape
    tgt2d = target.reshape(n, 1).astype(jnp.int32)

    prof = _chip_profile()
    itemsize = jnp.dtype(logits.dtype).itemsize
    align = 16 if itemsize < 4 else 8

    if tile_n is None:
        tile_n = _pick_tile_n(n, c, itemsize, prof["vmem_budget"], prof["hbm_block"])
    tile_n = max(align, (tile_n // align) * align)

    nb = pl.cdiv(n, tile_n)                    # total row blocks
    if num_splits is None:
        num_splits = prof["num_cores"]         # 1 on v5e/v6e, 2 on v7x
    num_splits = max(1, min(num_splits, nb))
    inner = pl.cdiv(nb, num_splits)            # row blocks per split

    # Only pay for the row-validity mask when remainder rows or clamped
    # duplicate blocks actually exist.
    mask_rows = (n % tile_n != 0) or (num_splits * inner != nb)

    def row_block(i, j):
        # Clamp so fully out-of-range blocks re-read a valid block; the kernel
        # masks their rows out of the partial sum.
        return (jnp.minimum(i * inner + j, nb - 1), 0)

    kernel = functools.partial(_focal_loss_kernel, gamma=gamma, n_rows=n,
                               tile_n=tile_n, mask_rows=mask_rows)

    if num_splits > 1 and prof["core_parallel"] and hasattr(pltpu, "CORE_PARALLEL"):
        dim_sem = (pltpu.CORE_PARALLEL, pltpu.ARBITRARY)   # real megacore split on v7x
    elif num_splits > 1:
        dim_sem = ("parallel", "arbitrary")
    else:
        dim_sem = ("arbitrary", "arbitrary")

    partials = pl.pallas_call(
        kernel,
        out_shape=jax.ShapeDtypeStruct((num_splits, 8, 128), jnp.float32),
        grid_spec=pltpu.PrefetchScalarGridSpec(
            num_scalar_prefetch=0,
            grid=(num_splits, inner),
            in_specs=[
                pl.BlockSpec((tile_n, c), row_block),
                pl.BlockSpec((tile_n, 1), row_block),
            ],
            out_specs=pl.BlockSpec((1, 8, 128), lambda i, j: (i, 0, 0)),
            scratch_shapes=[pltpu.VMEM((1, 1), jnp.float32)],
        ),
        compiler_params=pltpu.CompilerParams(
            dimension_semantics=dim_sem,
            vmem_limit_bytes=prof["vmem_limit"],
        ),
    )(logits, tgt2d)

    return jnp.sum(partials[:, 0, 0]) / jnp.float32(n)


def _focal_loss_ref(logits, target, gamma=2.0):
    # Pure-JAX reference for correctness checking.
    logits = logits.astype(jnp.float32)
    log_softmax = jax.nn.log_softmax(logits, axis=-1)
    logp = -jnp.take_along_axis(log_softmax, target[:, None].astype(jnp.int32), axis=-1)[:, 0]
    p = jnp.exp(-logp)
    return jnp.mean((1.0 - p) ** gamma * logp)


if __name__ == "__main__":
    key = jax.random.PRNGKey(0)
    k1, k2, k3, k4 = jax.random.split(key, 4)

    # Small (N, C) consistent with CrossEntropyLoss input; N not a multiple of 8
    # exercises the remainder-row mask.
    N, C = 13, 32
    logits = jax.random.normal(k1, (N, C), dtype=jnp.float32)
    target = jax.random.randint(k2, (N,), 0, C, dtype=jnp.int32)

    loss = jax.block_until_ready(focal_loss(logits, target, gamma=2.0))
    ref = _focal_loss_ref(logits, target, gamma=2.0)
    assert jnp.allclose(loss, ref, atol=1e-5, rtol=1e-5), (loss, ref)

    # Multi-block path (grid accumulation; core split where the chip has 2 TCs)
    # with bf16 logits (halves HBM traffic; math stays f32 in-kernel).
    N2, C2 = 200, 32
    logits2 = jax.random.normal(k3, (N2, C2), dtype=jnp.float32).astype(jnp.bfloat16)
    target2 = jax.random.randint(k4, (N2,), 0, C2, dtype=jnp.int32)

    loss2 = jax.block_until_ready(focal_loss(logits2, target2, gamma=2.0, tile_n=32))
    ref2 = _focal_loss_ref(logits2.astype(jnp.float32), target2, gamma=2.0)
    assert jnp.allclose(loss2, ref2, atol=1e-5, rtol=1e-5), (loss2, ref2)

    # Auto-sized (big-tile) path on the bf16 input as well.
    loss3 = jax.block_until_ready(focal_loss(logits2, target2, gamma=2.0))
    assert jnp.allclose(loss3, ref2, atol=1e-5, rtol=1e-5), (loss3, ref2)

    print("KERNEL_OK")
</pallas_src>

<mosaic_0001>
module attributes {stable_mosaic.version = 11 : i64} {
  func.func @_focal_loss_kernel(%arg0: i32, %arg1: i32, %arg2: memref<16x32xf32, #tpu.memory_space<vmem>>, %arg3: memref<16x1xi32, #tpu.memory_space<vmem>>, %arg4: memref<1x8x128xf32, #tpu.memory_space<vmem>>, %arg5: memref<1x1xf32, #tpu.memory_space<vmem>>) attributes {dimension_semantics = [#tpu.dimension_semantics<arbitrary>, #tpu.dimension_semantics<arbitrary>], iteration_bounds = array<i64: 1, 1>, scalar_prefetch = 0 : i64, scratch_operands = 1 : i64, tpu.core_type = #tpu.core_type<tc>, window_params = [{transform_indices = @transform_0, window_bounds = array<i64: 16, 32>}, {transform_indices = @transform_1, window_bounds = array<i64: 16, 1>}, {transform_indices = @transform_2, window_bounds = array<i64: 1, 8, 128>}]} {
    %c0_i32 = arith.constant 0 : i32
    %0 = arith.cmpi eq, %arg1, %c0_i32 : i32
    %1 = arith.extui %0 : i1 to i32
    %c0_i32_0 = arith.constant 0 : i32
    %2 = arith.cmpi ne, %1, %c0_i32_0 : i32
    scf.if %2 {
      %cst_18 = arith.constant 0.000000e+00 : f32
      %49 = vector.broadcast %cst_18 : f32 to vector<1x1xf32>
      %c0_19 = arith.constant 0 : index
      %c0_20 = arith.constant 0 : index
      %50 = vector.load %arg5[%c0_19, %c0_20] : memref<1x1xf32, #tpu.memory_space<vmem>>, vector<1x1xf32>
      tpu.vector_store %arg5[%c0_19, %c0_20], %49 {strides = array<i32>} : memref<1x1xf32, #tpu.memory_space<vmem>>, vector<1x1xf32>,
    } else {
    }
    %c0 = arith.constant 0 : index
    %c0_1 = arith.constant 0 : index
    %3 = vector.load %arg2[%c0, %c0_1] : memref<16x32xf32, #tpu.memory_space<vmem>>, vector<16x32xf32>
    %c0_2 = arith.constant 0 : index
    %c0_3 = arith.constant 0 : index
    %4 = vector.load %arg3[%c0_2, %c0_3] : memref<16x1xi32, #tpu.memory_space<vmem>>, vector<16x1xi32>
    %cst = arith.constant dense<0xFF800000> : vector<16xf32>
    %5 = vector.multi_reduction <maximumf>, %3, %cst [1] : vector<16x32xf32> to vector<16xf32>
    %6 = vector.shape_cast %5 : vector<16xf32> to vector<16x1xf32>
    %7 = vector.broadcast %6 : vector<16x1xf32> to vector<16x32xf32>
    %8 = arith.subf %3, %7 : vector<16x32xf32>
    %9 = math.exp %8 : vector<16x32xf32>
    %cst_4 = arith.constant dense<0.000000e+00> : vector<16xf32>
    %10 = vector.multi_reduction <add>, %9, %cst_4 [1] : vector<16x32xf32> to vector<16xf32>
    %11 = vector.shape_cast %10 : vector<16xf32> to vector<16x1xf32>
    %12 = math.log %11 : vector<16x1xf32>
    %13 = tpu.iota {dimensions = array<i32: 1>} : vector<16x32xi32>
    %14 = vector.broadcast %4 : vector<16x1xi32> to vector<16x32xi32>
    %15 = arith.cmpi eq, %13, %14 : vector<16x32xi32>
    %cst_5 = arith.constant 0.000000e+00 : f32
    %16 = vector.broadcast %cst_5 : f32 to vector<16x32xf32>
    %17 = arith.select %15, %3, %16 : vector<16x32xi1>, vector<16x32xf32>
    %cst_6 = arith.constant dense<0.000000e+00> : vector<16xf32>
    %18 = vector.multi_reduction <add>, %17, %cst_6 [1] : vector<16x32xf32> to vector<16xf32>
    %19 = vector.shape_cast %18 : vector<16xf32> to vector<16x1xf32>
    %20 = arith.addf %6, %12 : vector<16x1xf32>
    %21 = arith.subf %20, %19 : vector<16x1xf32>
    %cst_7 = arith.constant 0.000000e+00 : f32
    %22 = vector.broadcast %cst_7 : f32 to vector<16x1xf32>
    %23 = arith.subf %22, %21 : vector<16x1xf32>
    %24 = math.exp %23 : vector<16x1xf32>
    %cst_8 = arith.constant 1.000000e+00 : f32
    %25 = vector.broadcast %cst_8 : f32 to vector<16x1xf32>
    %26 = arith.subf %25, %24 : vector<16x1xf32>
    %cst_9 = arith.constant 0.000000e+00 : f32
    %27 = vector.broadcast %cst_9 : f32 to vector<16x1xf32>
    %28 = arith.maximumf %26, %27 : vector<16x1xf32>
    %29 = arith.mulf %28, %28 : vector<16x1xf32>
    %30 = arith.mulf %29, %21 : vector<16x1xf32>
    %c1_i32 = arith.constant 1 : i32
    %31 = arith.muli %arg0, %c1_i32 : i32
    %32 = arith.addi %31, %arg1 : i32
    %33 = tpu.iota {dimensions = array<i32: 0>} : vector<16x1xi32>
    %c16_i32 = arith.constant 16 : i32
    %34 = arith.muli %32, %c16_i32 : i32
    %35 = vector.broadcast %34 : i32 to vector<16x1xi32>
    %36 = arith.addi %35, %33 : vector<16x1xi32>
    %c13_i32 = arith.constant 13 : i32
    %37 = vector.broadcast %c13_i32 : i32 to vector<16x1xi32>
    %38 = arith.cmpi slt, %36, %37 : vector<16x1xi32>
    %cst_10 = arith.constant 0.000000e+00 : f32
    %39 = vector.broadcast %cst_10 : f32 to vector<16x1xf32>
    %40 = arith.select %38, %30, %39 : vector<16x1xi1>, vector<16x1xf32>
    %c0_11 = arith.constant 0 : index
    %c0_12 = arith.constant 0 : index
    %41 = vector.load %arg5[%c0_11, %c0_12] : memref<1x1xf32, #tpu.memory_space<vmem>>, vector<1x1xf32>
    %cst_13 = arith.constant dense<0.000000e+00> : vector<1xf32>
    %42 = vector.multi_reduction <add>, %40, %cst_13 [0] : vector<16x1xf32> to vector<1xf32>
    %43 = vector.shape_cast %42 : vector<1xf32> to vector<1x1xf32>
    %44 = arith.addf %41, %43 : vector<1x1xf32>
    %c0_14 = arith.constant 0 : index
    %c0_15 = arith.constant 0 : index
    %45 = vector.load %arg5[%c0_14, %c0_15] : memref<1x1xf32, #tpu.memory_space<vmem>>, vector<1x1xf32>
    tpu.vector_store %arg5[%c0_14, %c0_15], %44 {strides = array<i32>} : memref<1x1xf32, #tpu.memory_space<vmem>>, vector<1x1xf32>,
    %c0_i32_16 = arith.constant 0 : i32
    %46 = arith.cmpi eq, %arg1, %c0_i32_16 : i32
    %47 = arith.extui %46 : i1 to i32
    %c0_i32_17 = arith.constant 0 : i32
    %48 = arith.cmpi ne, %47, %c0_i32_17 : i32
    scf.if %48 {
      %c0_18 = arith.constant 0 : index
      %c0_19 = arith.constant 0 : index
      %49 = vector.load %arg5[%c0_18, %c0_19] : memref<1x1xf32, #tpu.memory_space<vmem>>, vector<1x1xf32>
      %50 = vector.shape_cast %49 : vector<1x1xf32> to vector<1x1xf32>
      %51 = vector.broadcast %50 : vector<1x1xf32> to vector<8x128xf32>
      %c0_20 = arith.constant 0 : index
      %c0_21 = arith.constant 0 : index
      %c0_22 = arith.constant 0 : index
      %52 = vector.load %arg4[%c0_20, %c0_21, %c0_22] : memref<1x8x128xf32, #tpu.memory_space<vmem>>, vector<1x8x128xf32>
      %53 = vector.shape_cast %52 : vector<1x8x128xf32> to vector<8x128xf32>
      %54 = vector.shape_cast %51 : vector<8x128xf32> to vector<1x8x128xf32>
      tpu.vector_store %arg4[%c0_20, %c0_21, %c0_22], %54 {strides = array<i32>} : memref<1x8x128xf32, #tpu.memory_space<vmem>>, vector<1x8x128xf32>,
    } else {
    }
    return
  }
  func.func @transform_0(%arg0: i32, %arg1: i32) -> (i32, i32) {
    %c1_i32 = arith.constant 1 : i32
    %0 = arith.muli %arg0, %c1_i32 : i32
    %1 = arith.addi %0, %arg1 : i32
    %c0_i32 = arith.constant 0 : i32
    %2 = arith.minsi %1, %c0_i32 : i32
    %c0_i32_0 = arith.constant 0 : i32
    %c0_i32_1 = arith.constant 0 : i32
    return %2, %c0_i32_0 : i32, i32
  }
  func.func @transform_1(%arg0: i32, %arg1: i32) -> (i32, i32) {
    %c1_i32 = arith.constant 1 : i32
    %0 = arith.muli %arg0, %c1_i32 : i32
    %1 = arith.addi %0, %arg1 : i32
    %c0_i32 = arith.constant 0 : i32
    %2 = arith.minsi %1, %c0_i32 : i32
    %c0_i32_0 = arith.constant 0 : i32
    %c0_i32_1 = arith.constant 0 : i32
    return %2, %c0_i32_0 : i32, i32
  }
  func.func @transform_2(%arg0: i32, %arg1: i32) -> (i32, i32, i32) {
    %c0_i32 = arith.constant 0 : i32
    %c0_i32_0 = arith.constant 0 : i32
    %c0_i32_1 = arith.constant 0 : i32
    return %arg0, %c0_i32, %c0_i32_0 : i32, i32, i32
  }
}

</mosaic_0001>

<llo_original>
// kernel: tpu_custom_call.1
$region0: #{tpu_custom_call.1}
  #allocation0 [shape = 'u32[]', space=smem, size = 0x4, offset = 0x4, fixed_abs, tag = 'smem constant byte address 0x4 - core index']
  #allocation1 [shape = 'u32[144,128]{1,0:T(1,128)}', space=vmem, size = 0x12000, scoped, tag = 'internal scratch']
  #allocation2 [shape = 'f32[1,1]{1,0:T(1,128)}', space=vmem, size = 0x200, scoped, tag = 'scratch operand']
  %s0 = inlined_call_operand.vmem [shape: f32[13,32], index: 0, kind: input, shape index: {}]
  %s1 = inlined_call_operand.vmem [shape: s32[13,1], index: 1, kind: input, shape index: {}]
  %s2 = inlined_call_operand.hbm [shape: f32[1,8,128], index: 2, kind: output, shape index: {}]
  %s3 = sld [smem:[#allocation0]]
  $region26: #{tpu_custom_call.1} parent=0
    _
  %s5 = ssub.s32 1, %s3
  %s6 = scalar_select 0, %s5, %s3
  $region1: #{tpu_custom_call.1} parent=0
    #allocation3 [shape = 'u8[4096]{0}', space=vmem, size = 0x1000, scoped, tag = 'output window, operand 0, single buffered']
    #allocation4 [shape = 's32[1]{0}', space=sflag, size = 0x4, scoped, tag = 'scoped memory for tpu_custom_call.1']
    %7 = vsyncpa [#allocation4], 0
    // Predicated region
    $region2: #{tpu_custom_call.1} parent=1 // pred_check
      _
    $region3: #{tpu_custom_call.1} parent=1 // pred_check_branch
      %9 = sbr.rel (0) target = $region5
    $region4: #{tpu_custom_call.1} parent=1 // pred_region
      %s10 = sadd.s32 0, 0
      %p11 = scmp.lt.s32.totalorder %s10, 0
      %s12 = scalar_select %p11, %s10, 0
      %s13 = smul.u32 2, %s12
      %p14 = scmp.lt.s32.totalorder %s13, 1
      %s15 = scalar_select %p14, %s13, 1
      %s16 = smul.addr %s15, 8
      %s17 = scalar_lea.vmem %s0, %s16
      %s18 = sadd.s32 0, 0
      %p19 = scmp.lt.s32.totalorder %s18, 0
      %s20 = scalar_select %p19, %s18, 0
      %s21 = smul.u32 2, %s20
    $region5: #{tpu_custom_call.1} parent=1 // pred_fallthru
      _
    // Predicated region
    $region6: #{tpu_custom_call.1} parent=1 // pred_check
      _
    $region7: #{tpu_custom_call.1} parent=1 // pred_check_branch
      %23 = sbr.rel (0) target = $region9
    $region8: #{tpu_custom_call.1} parent=1 // pred_region
      %s24 = sadd.s32 0, 0
      %p25 = scmp.lt.s32.totalorder %s24, 0
      %s26 = scalar_select %p25, %s24, 0
      %s27 = smul.u32 2, %s26
      %p28 = scmp.lt.s32.totalorder %s27, 1
      %s29 = scalar_select %p28, %s27, 1
      %s30 = smul.addr %s29, 8
      %s31 = scalar_lea.vmem %s1, %s30
      %s32 = sadd.s32 0, 0
      %p33 = scmp.lt.s32.totalorder %s32, 0
      %s34 = scalar_select %p33, %s32, 0
      %s35 = smul.u32 2, %s34
    $region9: #{tpu_custom_call.1} parent=1 // pred_fallthru
      _
    %s36 = sadd.s32 0, 0
    %p37 = scmp.lt.s32.totalorder %s36, 0
    %s38 = scalar_select %p37, %s36, 0
    %s39 = smul.u32 2, %s38
    %p40 = scmp.lt.s32.totalorder %s39, 1
    %s41 = scalar_select %p40, %s39, 1
    %s42 = smul.addr %s41, 8
    %s43 = scalar_lea.vmem %s0, %s42
    %s44 = sadd.s32 0, 0
    %p45 = scmp.lt.s32.totalorder %s44, 0
    %s46 = scalar_select %p45, %s44, 0
    %s47 = smul.u32 2, %s46
    %p48 = scmp.lt.s32.totalorder %s47, 1
    %s49 = scalar_select %p48, %s47, 1
    %s50 = smul.addr %s49, 8
    %s51 = scalar_lea.vmem %s1, %s50
    %s52 = sadd.s32 0, 0
    %p53 = scmp.lt.s32.totalorder %s52, 0
    %s54 = scalar_select %p53, %s52, 0
    %s55 = smul.u32 2, %s54
    %p56 = scmp.lt.s32.totalorder %s55, 1
    %s57 = scalar_select %p56, %s55, 1
    %s58 = smul.addr %s57, 8
    %s59 = scalar_lea.vmem %s0, %s58
    %s60 = sadd.s32 0, 0
    %p61 = scmp.lt.s32.totalorder %s60, 0
    %s62 = scalar_select %p61, %s60, 0
    %s63 = smul.u32 2, %s62
    %s64 = sadd.s32 0, 0
    %p65 = scmp.lt.s32.totalorder %s64, 0
    %s66 = scalar_select %p65, %s64, 0
    %s67 = smul.u32 2, %s66
    %p68 = scmp.lt.s32.totalorder %s67, 1
    %s69 = scalar_select %p68, %s67, 1
    %s70 = smul.addr %s69, 8
    %s71 = scalar_lea.vmem %s1, %s70
    %s72 = sadd.s32 0, 0
    %p73 = scmp.lt.s32.totalorder %s72, 0
    %s74 = scalar_select %p73, %s72, 0
    %s75 = smul.u32 2, %s74
    %p76 = scmp.eq.s32.totalorder 0, 0
    // Predicated region
    $region10: #{tpu_custom_call.1} parent=1 // pred_check
      %p77 = pneg %p76
    $region11: #{tpu_custom_call.1} parent=1 // pred_check_branch
      %79 = sbr.rel (%p77) target = $region13
    $region12: #{tpu_custom_call.1} parent=1 // pred_region
      %vm80 = vcmask 0
      %81 = vst.msk [vmem:[#allocation2] sm:$0x1] %vm80, 0.0
    $region13: #{tpu_custom_call.1} parent=1 // pred_fallthru
      _
    %v82 = vld [vmem:[%s59] sm:$0xff]
    %v83 = vld [vmem:[%s59 + $0x8] sm:$0xff]
    %v84 = vld [vmem:[%s71] sm:$0xff]
    %v85 = vld [vmem:[%s71 + $0x8] sm:$0xff]
    %vm86 = vcmask 261120
    %v87 = vsel %vm86, %v82, -inf
    %88 = vmax.xlane.f32.xlu0 %v87
    %v89 = vpop.xlane.xlu0 %88
    %v90 = vsel %vm86, %v83, -inf
    %91 = vmax.xlane.f32.xlu0 %v90
    %v92 = vpop.xlane.xlu0 %91
    %v93 = vsub.f32 %v82, %v89
    %v94 = vsub.f32 %v83, %v92
    %v95 = vmul.f32 %v93, 1.442695
    %v96 = vpow.pop %v95
    %v97 = vmul.f32 %v94, 1.442695
    %v98 = vpow.pop %v97
    %v99 = vsel %vm86, %v96, 0.0
    %100 = vadd.xlane.f32.xlu0 %v99
    %v101 = vpop.xlane.xlu0 %100
    %v102 = vsel %vm86, %v98, 0.0
    %103 = vadd.xlane.f32.xlu0 %v102
    %v104 = vpop.xlane.xlu0 %103
    %v105 = vlog2.pop %v101
    %v106 = vmul.f32 %v105, 0.6931472
    %v107 = vlog2.pop %v104
    %v108 = vmul.f32 %v107, 0.6931472
    %v109 = vlaneseq
    %v110 = vand.u32 %v109, 127
    %111 = vset.pattern.permute.xlu0 0
    %112 = vperm.xlu0 %111, %v84
    %v113 = vpop.permute.xlu0 %112
    %114 = vset.pattern.permute.xlu0 0
    %115 = vperm.xlu0 %114, %v85
    %v116 = vpop.permute.xlu0 %115
    %vm117 = vcmp.eq.s32.totalorder %v110, %v113
    %vm118 = vcmp.eq.s32.totalorder %v110, %v116
    %v119 = vsel %vm117, %v82, 0.0
    %v120 = vsel %vm118, %v83, 0.0
    %v121 = vsel %vm86, %v119, 0.0
    %122 = vadd.xlane.f32.xlu0 %v121
    %v123 = vpop.xlane.xlu0 %122
    %v124 = vsel %vm86, %v120, 0.0
    %125 = vadd.xlane.f32.xlu0 %v124
    %v126 = vpop.xlane.xlu0 %125
    %v127 = vadd.f32 %v89, %v106
    %v128 = vadd.f32 %v92, %v108
    %v129 = vsub.f32 %v127, %v123
    %v130 = vsub.f32 %v128, %v126
    %v131 = vsub.f32 0.0, %v129
    %v132 = vsub.f32 0.0, %v130
    %v133 = vmul.f32 %v131, 1.442695
    %v134 = vpow.pop %v133
    %v135 = vmul.f32 %v132, 1.442695
    %v136 = vpow.pop %v135
    %v137 = vsub.f32 1.0, %v134
    %v138 = vsub.f32 1.0, %v136
    %v139 = vmax.f32 %v137, 0.0
    %v140 = vmax.f32 %v138, 0.0
    %v141 = vmul.f32 %v139, %v139
    %v142 = vmul.f32 %v140, %v140
    %v143 = vmul.f32 %v141, %v129
    %v144 = vmul.f32 %v142, %v130
    %s145 = sadd.s32 0, 0
    %v146 = vlaneseq
    %v147 = vshrl.u32 %v146, 7
    %v148 = vadd.s32 %v147, 8
    %s149 = smul.u32 %s145, 16
    %v150 = vstv %s149
    %v151 = vadd.s32 %v150, %v147
    %v152 = vadd.s32 %v150, %v148
    %vm153 = vcmp.lt.s32.totalorder %v151, 13
    %vm154 = vcmp.lt.s32.totalorder %v152, 13
    %v155 = vsel %vm153, %v143, 0.0
    %v156 = vsel %vm154, %v144, 0.0
    %v157 = vld [vmem:[#allocation2] sm:$0x1]
    %v158 = vadd.f32 %v155, %v156
    %v159 = vrot.slane %v158, 4
    %v160 = vadd.f32 %v158, %v159
    %v161 = vrot.slane %v160, 2
    %v162 = vadd.f32 %v160, %v161
    %v163 = vrot.slane %v162, 1
    %v164 = vadd.f32 %v162, %v163
    %v165 = vadd.f32 %v157, %v164
    %vm166 = vcmask 0
    %167 = vst.msk [vmem:[#allocation2] sm:$0x1] %vm166, %v165
    // Predicated region
    $region14: #{tpu_custom_call.1} parent=1 // pred_check
      %p168 = pneg %p76
    $region15: #{tpu_custom_call.1} parent=1 // pred_check_branch
      %170 = sbr.rel (%p168) target = $region17
    $region16: #{tpu_custom_call.1} parent=1 // pred_region
      %v171 = vld [vmem:[#allocation2] sm:$0x1]
      %v173 = vlaneseq
      %v174 = vshrl.u32 %v173, 7
      %v175 = vsub.s32 0, %v174
      %v176 = vrot.slane %v171, %v175
      %177 = vset.pattern.permute.xlu0 0
      %178 = vperm.xlu0 %177, %v176
      %v179 = vpop.permute.xlu0 %178
      %181 = vst [vmem:[#allocation3] sm:$0xff] %v179
    $region17: #{tpu_custom_call.1} parent=1 // pred_fallthru
      _
    // Predicated region
    $region18: #{tpu_custom_call.1} parent=1 // pred_check
      _
    $region19: #{tpu_custom_call.1} parent=1 // pred_check_branch
      %183 = sbr.rel (0) target = $region21
    $region20: #{tpu_custom_call.1} parent=1 // pred_region
      %s185 = ssub.s32 128, 128
      %186 = vsyncadd [#allocation4], %s185
      %s188 = sshll.u32 [#allocation3], 4
      %s189 = int_to_ptr.vmem [resolvable:$true] %s188
      %191 = dma.vmem_to_hbm [thread:$0]  %s189, 128, %s2, [#allocation4]
    $region21: #{tpu_custom_call.1} parent=1 // pred_fallthru
      _
    // Predicated region
    $region22: #{tpu_custom_call.1} parent=1 // pred_check
      _
    $region23: #{tpu_custom_call.1} parent=1 // pred_check_branch
      %193 = sbr.rel (0) target = $region25
    $region24: #{tpu_custom_call.1} parent=1 // pred_region
      %194 = dma.done [#allocation4], 128
    $region25: #{tpu_custom_call.1} parent=1 // pred_fallthru
      _
    %195 = vsyncpa [#allocation4], 1

</llo_original>
